<compile_context>
chip_gen: v7x
topology: tpu7x:2x2x1
jax: 0.10.0
libtpu: 0.0.40
codegen_flags: <defaults>
</compile_context>

<pallas_src>
import jax
import jax.numpy as jnp
from jax.experimental import pallas as pl
from jax.experimental.pallas import tpu as pltpu


_NEG_BIG = -1e30  # stands in for -inf; exp(-1e30 - m) underflows to exactly 0 in f32.


def attention_kernel(dec_ref, enc_ref, bias_ref, we_ref, be_ref, wd_ref, bd_ref,
                     v_ref, ctx_ref, attn_ref):
    enc = enc_ref[...]                                    # (TB, S, H)
    dec = dec_ref[...]                                    # (TB, H)
    TB, S, H = enc.shape
    A = we_ref.shape[1]

    # Encoder projection: one MXU matmul over the whole (TB*S, H) slab.
    enc_proj = jnp.dot(enc.reshape(TB * S, H), we_ref[...],
                       preferred_element_type=jnp.float32).reshape(TB, S, A)

    # Decoder projection for the whole batch tile; both biases broadcast over S,
    # so fold them into the (TB, A) term once.
    dec_proj = (jnp.dot(dec, wd_ref[...], preferred_element_type=jnp.float32)
                + bd_ref[...] + be_ref[...])              # (TB, A)

    energy = jnp.tanh(enc_proj + dec_proj[:, None, :])    # (TB, S, A)

    # Score: VPU multiply + lane reduce (avoids an N=1 MXU matmul).
    scores = jnp.sum(energy * v_ref[...], axis=-1)        # (TB, S)
    scores = scores + bias_ref[...]                       # additive mask bias

    # Row-wise numerically stable softmax over the sequence axis.
    m = jnp.max(scores, axis=-1, keepdims=True)
    e = jnp.exp(scores - m)
    attn = e * pl.reciprocal(jnp.sum(e, axis=-1, keepdims=True), approx=False)

    # Context: weighted sum over S (VPU multiply + sublane reduce).
    ctx = jnp.sum(attn[:, :, None] * enc, axis=1)         # (TB, H)

    ctx_ref[...] = ctx.astype(ctx_ref.dtype)
    attn_ref[...] = attn.astype(attn_ref.dtype)


def _pick_batch_tile(B, S, H, itemsize, target_bytes=2 * 1024 * 1024):
    """Largest divisor of B whose (TB, S, H) enc block is <= target_bytes."""
    per_row = max(1, S * H * itemsize)
    cap = max(1, target_bytes // per_row)
    tb = 1
    for d in range(1, B + 1):
        if B % d == 0 and d <= cap:
            tb = d
    return tb


def attention_pallas(dec_hidden, enc_outputs, We, be, Wd, bd, v, mask=None,
                     block_b=None):
    """dec_hidden: (B, H); enc_outputs: (B, S, H).
    We, Wd: (H, A) (already transposed from torch's (A, H)); be, bd: (A,); v: (A,).
    mask: optional bool (B, S); False positions receive ~-inf energy.
    Returns (context (B, H), attention_weights (B, S))."""
    B, S, H = enc_outputs.shape
    A = We.shape[1]

    if block_b is None:
        block_b = _pick_batch_tile(B, S, H, jnp.dtype(enc_outputs.dtype).itemsize)
    TB = block_b
    assert B % TB == 0, "batch tile must divide batch size"

    be2 = be.reshape(1, A)
    bd2 = bd.reshape(1, A)
    v2 = v.reshape(1, A)

    if mask is None:
        bias = jnp.zeros((B, S), dtype=jnp.float32)
    else:
        # NOTE: a fully-masked row gives uniform weights here (PyTorch gives NaN).
        bias = jnp.where(mask, 0.0, _NEG_BIG).astype(jnp.float32)

    out_shapes = (
        jax.ShapeDtypeStruct((B, H), dec_hidden.dtype),
        jax.ShapeDtypeStruct((B, S), dec_hidden.dtype),
    )

    grid_spec = pltpu.PrefetchScalarGridSpec(
        num_scalar_prefetch=0,
        grid=(B // TB,),
        in_specs=[
            pl.BlockSpec((TB, H), lambda b: (b, 0)),        # dec_hidden
            pl.BlockSpec((TB, S, H), lambda b: (b, 0, 0)),  # enc_outputs
            pl.BlockSpec((TB, S), lambda b: (b, 0)),        # mask bias
            pl.BlockSpec((H, A), lambda b: (0, 0)),         # We (stays resident)
            pl.BlockSpec((1, A), lambda b: (0, 0)),         # be
            pl.BlockSpec((H, A), lambda b: (0, 0)),         # Wd (stays resident)
            pl.BlockSpec((1, A), lambda b: (0, 0)),         # bd
            pl.BlockSpec((1, A), lambda b: (0, 0)),         # v
        ],
        out_specs=[
            pl.BlockSpec((TB, H), lambda b: (b, 0)),        # context
            pl.BlockSpec((TB, S), lambda b: (b, 0)),        # attention weights
        ],
    )

    return pl.pallas_call(
        attention_kernel,
        out_shape=out_shapes,
        grid_spec=grid_spec,
        compiler_params=pltpu.CompilerParams(
            dimension_semantics=("parallel",),
            vmem_limit_bytes=32 * 1024 * 1024,
        ),
    )(dec_hidden, enc_outputs, bias, We, be2, Wd, bd2, v2)


def attention_reference(dec_hidden, enc_outputs, We, be, Wd, bd, v, mask=None):
    enc_proj = enc_outputs @ We + be                        # (B, S, A)
    dec_proj = (dec_hidden @ Wd + bd)[:, None, :]           # (B, 1, A)
    energy = jnp.tanh(enc_proj + dec_proj)                  # (B, S, A)
    scores = energy @ v                                     # (B, S)
    if mask is not None:
        scores = jnp.where(mask, scores, _NEG_BIG)
    attn = jax.nn.softmax(scores, axis=1)
    ctx = jnp.einsum('bs,bsh->bh', attn, enc_outputs)
    return ctx, attn


if __name__ == "__main__":
    B, S, H = 2, 8, 32
    A = H  # attention_dim defaults to hidden_dim

    key = jax.random.PRNGKey(0)
    k_dec, k_enc, k_we, k_be, k_wd, k_bd, k_v = jax.random.split(key, 7)

    dec_hidden = jax.random.normal(k_dec, (B, H), dtype=jnp.float32)
    enc_outputs = jax.random.normal(k_enc, (B, S, H), dtype=jnp.float32)

    # nn.Linear weights are (out, in); stored here pre-transposed as (in, out).
    We = jax.random.normal(k_we, (H, A), dtype=jnp.float32) * 0.1
    be = jax.random.normal(k_be, (A,), dtype=jnp.float32) * 0.1
    Wd = jax.random.normal(k_wd, (H, A), dtype=jnp.float32) * 0.1
    bd = jax.random.normal(k_bd, (A,), dtype=jnp.float32) * 0.1
    v = jax.random.normal(k_v, (A,), dtype=jnp.float32) * 0.1

    # Unmasked path (mask=None in the module).
    ctx, attn = attention_pallas(dec_hidden, enc_outputs, We, be, Wd, bd, v)
    jax.block_until_ready((ctx, attn))
    ctx_want, attn_want = attention_reference(dec_hidden, enc_outputs, We, be, Wd, bd, v)
    assert jnp.allclose(ctx, ctx_want, atol=1e-5, rtol=1e-5)
    assert jnp.allclose(attn, attn_want, atol=1e-5, rtol=1e-5)

    # Masked path (masked_fill(~mask, -inf) before the softmax); keep at least one
    # valid position per row (an all-masked row is NaN in PyTorch as well).
    lengths = jnp.array([S, S - 3], dtype=jnp.int32)
    mask = jnp.arange(S)[None, :] < lengths[:, None]        # (B, S) bool
    ctx_m, attn_m = attention_pallas(dec_hidden, enc_outputs, We, be, Wd, bd, v,
                                     mask=mask)
    jax.block_until_ready((ctx_m, attn_m))
    ctx_mw, attn_mw = attention_reference(dec_hidden, enc_outputs, We, be, Wd, bd, v,
                                          mask=mask)
    assert jnp.allclose(ctx_m, ctx_mw, atol=1e-5, rtol=1e-5)
    assert jnp.allclose(attn_m, attn_mw, atol=1e-5, rtol=1e-5)

    print("KERNEL_OK")
</pallas_src>

<mosaic_0001>
module attributes {stable_mosaic.version = 11 : i64} {
  func.func @attention_kernel(%arg0: i32, %arg1: memref<2x32xf32, #tpu.memory_space<vmem>>, %arg2: memref<2x8x32xf32, #tpu.memory_space<vmem>>, %arg3: memref<2x8xf32, #tpu.memory_space<vmem>>, %arg4: memref<32x32xf32, #tpu.memory_space<vmem>>, %arg5: memref<1x32xf32, #tpu.memory_space<vmem>>, %arg6: memref<32x32xf32, #tpu.memory_space<vmem>>, %arg7: memref<1x32xf32, #tpu.memory_space<vmem>>, %arg8: memref<1x32xf32, #tpu.memory_space<vmem>>, %arg9: memref<2x32xf32, #tpu.memory_space<vmem>>, %arg10: memref<2x8xf32, #tpu.memory_space<vmem>>) attributes {dimension_semantics = [#tpu.dimension_semantics<parallel>], iteration_bounds = array<i64: 1>, scalar_prefetch = 0 : i64, scratch_operands = 0 : i64, tpu.core_type = #tpu.core_type<tc>, window_params = [{transform_indices = @transform_0, window_bounds = array<i64: 2, 32>}, {transform_indices = @transform_1, window_bounds = array<i64: 2, 8, 32>}, {transform_indices = @transform_2, window_bounds = array<i64: 2, 8>}, {pipeline_mode = #tpu.pipeline_mode<synchronous>, transform_indices = @transform_3, window_bounds = array<i64: 32, 32>}, {pipeline_mode = #tpu.pipeline_mode<synchronous>, transform_indices = @transform_4, window_bounds = array<i64: 1, 32>}, {pipeline_mode = #tpu.pipeline_mode<synchronous>, transform_indices = @transform_5, window_bounds = array<i64: 32, 32>}, {pipeline_mode = #tpu.pipeline_mode<synchronous>, transform_indices = @transform_6, window_bounds = array<i64: 1, 32>}, {pipeline_mode = #tpu.pipeline_mode<synchronous>, transform_indices = @transform_7, window_bounds = array<i64: 1, 32>}, {transform_indices = @transform_8, window_bounds = array<i64: 2, 32>}, {transform_indices = @transform_9, window_bounds = array<i64: 2, 8>}]} {
    %c0 = arith.constant 0 : index
    %c0_0 = arith.constant 0 : index
    %c0_1 = arith.constant 0 : index
    %0 = vector.load %arg2[%c0, %c0_0, %c0_1] : memref<2x8x32xf32, #tpu.memory_space<vmem>>, vector<2x8x32xf32>
    %c0_2 = arith.constant 0 : index
    %c0_3 = arith.constant 0 : index
    %1 = vector.load %arg1[%c0_2, %c0_3] : memref<2x32xf32, #tpu.memory_space<vmem>>, vector<2x32xf32>
    %2 = vector.shape_cast %0 : vector<2x8x32xf32> to vector<16x32xf32>
    %c0_4 = arith.constant 0 : index
    %c0_5 = arith.constant 0 : index
    %3 = vector.load %arg4[%c0_4, %c0_5] : memref<32x32xf32, #tpu.memory_space<vmem>>, vector<32x32xf32>
    %cst = arith.constant dense<0.000000e+00> : vector<16x32xf32>
    %4 = tpu.matmul %2, %3, %cst {dimension_numbers = #tpu.dot_dimension_numbers<[1], [0], [0], [1], [0, 0, 1, 1], [], []>} : vector<16x32xf32>, vector<32x32xf32>, vector<16x32xf32> -> vector<16x32xf32>
    %5 = vector.shape_cast %4 : vector<16x32xf32> to vector<2x8x32xf32>
    %c0_6 = arith.constant 0 : index
    %c0_7 = arith.constant 0 : index
    %6 = vector.load %arg6[%c0_6, %c0_7] : memref<32x32xf32, #tpu.memory_space<vmem>>, vector<32x32xf32>
    %cst_8 = arith.constant dense<0.000000e+00> : vector<2x32xf32>
    %7 = tpu.matmul %1, %6, %cst_8 {dimension_numbers = #tpu.dot_dimension_numbers<[1], [0], [0], [1], [0, 0, 1, 1], [], []>} : vector<2x32xf32>, vector<32x32xf32>, vector<2x32xf32> -> vector<2x32xf32>
    %c0_9 = arith.constant 0 : index
    %c0_10 = arith.constant 0 : index
    %8 = vector.load %arg7[%c0_9, %c0_10] : memref<1x32xf32, #tpu.memory_space<vmem>>, vector<1x32xf32>
    %9 = vector.broadcast %8 : vector<1x32xf32> to vector<2x32xf32>
    %10 = arith.addf %7, %9 : vector<2x32xf32>
    %c0_11 = arith.constant 0 : index
    %c0_12 = arith.constant 0 : index
    %11 = vector.load %arg5[%c0_11, %c0_12] : memref<1x32xf32, #tpu.memory_space<vmem>>, vector<1x32xf32>
    %12 = vector.broadcast %11 : vector<1x32xf32> to vector<2x32xf32>
    %13 = arith.addf %10, %12 : vector<2x32xf32>
    %14 = vector.shape_cast %13 : vector<2x32xf32> to vector<2x1x32xf32>
    %15 = vector.broadcast %14 : vector<2x1x32xf32> to vector<2x8x32xf32>
    %16 = arith.addf %5, %15 : vector<2x8x32xf32>
    %17 = math.tanh %16 : vector<2x8x32xf32>
    %c0_13 = arith.constant 0 : index
    %c0_14 = arith.constant 0 : index
    %18 = vector.load %arg8[%c0_13, %c0_14] : memref<1x32xf32, #tpu.memory_space<vmem>>, vector<1x32xf32>
    %19 = vector.shape_cast %18 : vector<1x32xf32> to vector<1x1x32xf32>
    %20 = vector.broadcast %19 : vector<1x1x32xf32> to vector<2x8x32xf32>
    %21 = arith.mulf %17, %20 : vector<2x8x32xf32>
    %cst_15 = arith.constant dense<0.000000e+00> : vector<2x8xf32>
    %22 = vector.multi_reduction <add>, %21, %cst_15 [2] : vector<2x8x32xf32> to vector<2x8xf32>
    %c0_16 = arith.constant 0 : index
    %c0_17 = arith.constant 0 : index
    %23 = vector.load %arg3[%c0_16, %c0_17] : memref<2x8xf32, #tpu.memory_space<vmem>>, vector<2x8xf32>
    %24 = arith.addf %22, %23 : vector<2x8xf32>
    %cst_18 = arith.constant dense<0xFF800000> : vector<2xf32>
    %25 = vector.multi_reduction <maximumf>, %24, %cst_18 [1] : vector<2x8xf32> to vector<2xf32>
    %26 = vector.shape_cast %25 : vector<2xf32> to vector<2x1xf32>
    %27 = vector.broadcast %26 : vector<2x1xf32> to vector<2x8xf32>
    %28 = arith.subf %24, %27 : vector<2x8xf32>
    %29 = math.exp %28 : vector<2x8xf32>
    %cst_19 = arith.constant dense<0.000000e+00> : vector<2xf32>
    %30 = vector.multi_reduction <add>, %29, %cst_19 [1] : vector<2x8xf32> to vector<2xf32>
    %31 = vector.shape_cast %30 : vector<2xf32> to vector<2x1xf32>
    %32 = tpu.reciprocal %31 : vector<2x1xf32> -> vector<2x1xf32>
    %33 = vector.broadcast %32 : vector<2x1xf32> to vector<2x8xf32>
    %34 = arith.mulf %29, %33 : vector<2x8xf32>
    %35 = vector.shape_cast %34 : vector<2x8xf32> to vector<2x8x1xf32>
    %36 = vector.broadcast %35 : vector<2x8x1xf32> to vector<2x8x32xf32>
    %37 = arith.mulf %36, %0 : vector<2x8x32xf32>
    %cst_20 = arith.constant dense<0.000000e+00> : vector<2x32xf32>
    %38 = vector.multi_reduction <add>, %37, %cst_20 [1] : vector<2x8x32xf32> to vector<2x32xf32>
    %c0_21 = arith.constant 0 : index
    %c0_22 = arith.constant 0 : index
    %39 = vector.load %arg9[%c0_21, %c0_22] : memref<2x32xf32, #tpu.memory_space<vmem>>, vector<2x32xf32>
    tpu.vector_store %arg9[%c0_21, %c0_22], %38 {strides = array<i32>} : memref<2x32xf32, #tpu.memory_space<vmem>>, vector<2x32xf32>,
    %c0_23 = arith.constant 0 : index
    %c0_24 = arith.constant 0 : index
    %40 = vector.load %arg10[%c0_23, %c0_24] : memref<2x8xf32, #tpu.memory_space<vmem>>, vector<2x8xf32>
    tpu.vector_store %arg10[%c0_23, %c0_24], %34 {strides = array<i32>} : memref<2x8xf32, #tpu.memory_space<vmem>>, vector<2x8xf32>,
    return
  }
  func.func @transform_0(%arg0: i32) -> (i32, i32) {
    %c0_i32 = arith.constant 0 : i32
    %c0_i32_0 = arith.constant 0 : i32
    return %arg0, %c0_i32 : i32, i32
  }
  func.func @transform_1(%arg0: i32) -> (i32, i32, i32) {
    %c0_i32 = arith.constant 0 : i32
    %c0_i32_0 = arith.constant 0 : i32
    %c0_i32_1 = arith.constant 0 : i32
    return %arg0, %c0_i32, %c0_i32_0 : i32, i32, i32
  }
  func.func @transform_2(%arg0: i32) -> (i32, i32) {
    %c0_i32 = arith.constant 0 : i32
    %c0_i32_0 = arith.constant 0 : i32
    return %arg0, %c0_i32 : i32, i32
  }
  func.func @transform_3(%arg0: i32) -> (i32, i32) {
    %c0_i32 = arith.constant 0 : i32
    %c0_i32_0 = arith.constant 0 : i32
    %c0_i32_1 = arith.constant 0 : i32
    return %c0_i32, %c0_i32_0 : i32, i32
  }
  func.func @transform_4(%arg0: i32) -> (i32, i32) {
    %c0_i32 = arith.constant 0 : i32
    %c0_i32_0 = arith.constant 0 : i32
    %c0_i32_1 = arith.constant 0 : i32
    return %c0_i32, %c0_i32_0 : i32, i32
  }
  func.func @transform_5(%arg0: i32) -> (i32, i32) {
    %c0_i32 = arith.constant 0 : i32
    %c0_i32_0 = arith.constant 0 : i32
    %c0_i32_1 = arith.constant 0 : i32
    return %c0_i32, %c0_i32_0 : i32, i32
  }
  func.func @transform_6(%arg0: i32) -> (i32, i32) {
    %c0_i32 = arith.constant 0 : i32
    %c0_i32_0 = arith.constant 0 : i32
    %c0_i32_1 = arith.constant 0 : i32
    return %c0_i32, %c0_i32_0 : i32, i32
  }
  func.func @transform_7(%arg0: i32) -> (i32, i32) {
    %c0_i32 = arith.constant 0 : i32
    %c0_i32_0 = arith.constant 0 : i32
    %c0_i32_1 = arith.constant 0 : i32
    return %c0_i32, %c0_i32_0 : i32, i32
  }
  func.func @transform_8(%arg0: i32) -> (i32, i32) {
    %c0_i32 = arith.constant 0 : i32
    %c0_i32_0 = arith.constant 0 : i32
    return %arg0, %c0_i32 : i32, i32
  }
  func.func @transform_9(%arg0: i32) -> (i32, i32) {
    %c0_i32 = arith.constant 0 : i32
    %c0_i32_0 = arith.constant 0 : i32
    return %arg0, %c0_i32 : i32, i32
  }
}

</mosaic_0001>

<llo_original>
// kernel: tpu_custom_call.1
$region0: #{tpu_custom_call.1}
  #allocation0 [shape = 'u32[]', space=smem, size = 0x4, offset = 0x4, fixed_abs, tag = 'smem constant byte address 0x4 - core index']
  #allocation1 [shape = 'u32[144,128]{1,0:T(1,128)}', space=vmem, size = 0x12000, scoped, tag = 'internal scratch']
  %s0 = inlined_call_operand.hbm [shape: f32[2,32], index: 0, kind: input, shape index: {}]
  %s1 = inlined_call_operand.hbm [shape: f32[2,8,32], index: 1, kind: input, shape index: {}]
  %s2 = inlined_call_operand.vmem [shape: f32[2,8], index: 2, kind: input, shape index: {}]
  %s3 = inlined_call_operand.hbm [shape: f32[32,32], index: 3, kind: input, shape index: {}]
  %s4 = inlined_call_operand.vmem [shape: f32[1,32], index: 4, kind: input, shape index: {}]
  %s5 = inlined_call_operand.hbm [shape: f32[32,32], index: 5, kind: input, shape index: {}]
  %s6 = inlined_call_operand.vmem [shape: f32[1,32], index: 6, kind: input, shape index: {}]
  %s7 = inlined_call_operand.vmem [shape: f32[1,32], index: 7, kind: input, shape index: {}]
  %s8 = inlined_call_operand.hbm [shape: f32[2,32], index: 8, kind: output, shape index: {0}]
  %s9 = inlined_call_operand.hbm [shape: f32[2,8], index: 9, kind: output, shape index: {1}]
  %10 = xla_tuple %s8, %s9
  %s11 = sld [smem:[#allocation0]]
  $region66: #{tpu_custom_call.1} parent=0
    _
  %s13 = ssub.s32 1, %s11
  %s14 = scalar_select 0, %s13, %s11
  $region1: #{tpu_custom_call.1} parent=0
    #allocation2 [shape = 'u8[1024]{0}', space=vmem, size = 0x400, scoped, tag = 'input window, operand 0, single buffered']
    #allocation3 [shape = 's32[1]{0}', space=sflag, size = 0x4, scoped, tag = 'scoped memory for tpu_custom_call.1']
    #allocation4 [shape = 's32[1]{0}', space=sflag, size = 0x4, scoped, tag = 'scoped memory for tpu_custom_call.1']
    #allocation5 [shape = 'u8[8192]{0}', space=vmem, size = 0x2000, scoped, tag = 'input window, operand 1, single buffered']
    #allocation6 [shape = 's32[1]{0}', space=sflag, size = 0x4, scoped, tag = 'scoped memory for tpu_custom_call.1']
    #allocation7 [shape = 'u8[16384]{0}', space=vmem, size = 0x4000, scoped, tag = 'input window, operand 3, single buffered']
    #allocation8 [shape = 'u8[16384]{0}', space=vmem, size = 0x4000, scoped, tag = 'input window, operand 5, single buffered']
    #allocation9 [shape = 's32[1]{0}', space=sflag, size = 0x4, scoped, tag = 'scoped memory for tpu_custom_call.1']
    #allocation10 [shape = 'u8[1024]{0}', space=vmem, size = 0x400, scoped, tag = 'output window, operand 0, single buffered']
    #allocation11 [shape = 'u8[1024]{0}', space=vmem, size = 0x400, scoped, tag = 'output window, operand 1, single buffered']
    #allocation12 [shape = 's32[1]{0}', space=sflag, size = 0x4, scoped, tag = 'scoped memory for tpu_custom_call.1']
    %15 = vsyncpa [#allocation3], 0
    %16 = vsyncpa [#allocation6], 0
    %17 = vsyncpa [#allocation9], 0
    %18 = vsyncpa [#allocation4], 0
    %19 = vsyncpa [#allocation12], 0
    // Predicated region
    $region2: #{tpu_custom_call.1} parent=1 // pred_check
      _
    $region3: #{tpu_custom_call.1} parent=1 // pred_check_branch
      %21 = sbr.rel (0) target = $region5
    $region4: #{tpu_custom_call.1} parent=1 // pred_region
      %s23 = ssub.s32 32, 32
      %24 = vsyncadd [#allocation3], %s23
      %s26 = sshll.u32 [#allocation2], 4
      %s27 = int_to_ptr.vmem [resolvable:$true] %s26
      %29 = dma.hbm_to_vmem [thread:$0]  %s0, 32, %s27, [#allocation3]
    $region5: #{tpu_custom_call.1} parent=1 // pred_fallthru
      _
    // Predicated region
    $region6: #{tpu_custom_call.1} parent=1 // pred_check
      _
    $region7: #{tpu_custom_call.1} parent=1 // pred_check_branch
      %31 = sbr.rel (0) target = $region9
    $region8: #{tpu_custom_call.1} parent=1 // pred_region
      %s33 = ssub.s32 256, 256
      %34 = vsyncadd [#allocation6], %s33
      %s35 = sshll.u32 [#allocation5], 4
      %s36 = int_to_ptr.vmem [resolvable:$true] %s35
      %41 = dma.hbm_to_vmem [thread:$0]  %s1, 256, %s36, [#allocation6], 128, 128, 8
    $region9: #{tpu_custom_call.1} parent=1 // pred_fallthru
      _
    // Predicated region
    $region10: #{tpu_custom_call.1} parent=1 // pred_check
      _
    $region11: #{tpu_custom_call.1} parent=1 // pred_check_branch
      %43 = sbr.rel (0) target = $region13
    $region12: #{tpu_custom_call.1} parent=1 // pred_region
      _
    $region13: #{tpu_custom_call.1} parent=1 // pred_fallthru
      _
    // Predicated region
    $region14: #{tpu_custom_call.1} parent=1 // pred_check
      _
    $region15: #{tpu_custom_call.1} parent=1 // pred_check_branch
      %45 = sbr.rel (0) target = $region17
    $region16: #{tpu_custom_call.1} parent=1 // pred_region
      %s47 = ssub.s32 512, 512
      %48 = vsyncadd [#allocation6], %s47
      %s49 = sshll.u32 [#allocation7], 4
      %s50 = int_to_ptr.vmem [resolvable:$true] %s49
      %55 = dma.hbm_to_vmem [thread:$0]  %s3, 512, %s50, [#allocation6], 128, 128, 8
    $region17: #{tpu_custom_call.1} parent=1 // pred_fallthru
      _
    // Predicated region
    $region18: #{tpu_custom_call.1} parent=1 // pred_check
      _
    $region19: #{tpu_custom_call.1} parent=1 // pred_check_branch
      %57 = sbr.rel (0) target = $region21
    $region20: #{tpu_custom_call.1} parent=1 // pred_region
      _
    $region21: #{tpu_custom_call.1} parent=1 // pred_fallthru
      _
    // Predicated region
    $region22: #{tpu_custom_call.1} parent=1 // pred_check
      _
    $region23: #{tpu_custom_call.1} parent=1 // pred_check_branch
      %59 = sbr.rel (0) target = $region25
    $region24: #{tpu_custom_call.1} parent=1 // pred_region
      %s61 = ssub.s32 512, 512
      %62 = vsyncadd [#allocation9], %s61
      %s63 = sshll.u32 [#allocation8], 4
      %s64 = int_to_ptr.vmem [resolvable:$true] %s63
      %69 = dma.hbm_to_vmem [thread:$0]  %s5, 512, %s64, [#allocation9], 128, 128, 8
    $region25: #{tpu_custom_call.1} parent=1 // pred_fallthru
      _
    // Predicated region
    $region26: #{tpu_custom_call.1} parent=1 // pred_check
      _
    $region27: #{tpu_custom_call.1} parent=1 // pred_check_branch
      %71 = sbr.rel (0) target = $region29
    $region28: #{tpu_custom_call.1} parent=1 // pred_region
      _
    $region29: #{tpu_custom_call.1} parent=1 // pred_fallthru
      _
    // Predicated region
    $region30: #{tpu_custom_call.1} parent=1 // pred_check
      _
    $region31: #{tpu_custom_call.1} parent=1 // pred_check_branch
      %73 = sbr.rel (0) target = $region33
    $region32: #{tpu_custom_call.1} parent=1 // pred_region
      _
    $region33: #{tpu_custom_call.1} parent=1 // pred_fallthru
      _
    // Predicated region
    $region34: #{tpu_custom_call.1} parent=1 // pred_check
      _
    $region35: #{tpu_custom_call.1} parent=1 // pred_check_branch
      %75 = sbr.rel (0) target = $region37
    $region36: #{tpu_custom_call.1} parent=1 // pred_region
      %76 = dma.done [#allocation3], 32
    $region37: #{tpu_custom_call.1} parent=1 // pred_fallthru
      _
    // Predicated region
    $region38: #{tpu_custom_call.1} parent=1 // pred_check
      _
    $region39: #{tpu_custom_call.1} parent=1 // pred_check_branch
      %78 = sbr.rel (0) target = $region41
    $region40: #{tpu_custom_call.1} parent=1 // pred_region
      %79 = dma.done [#allocation6], 256
    $region41: #{tpu_custom_call.1} parent=1 // pred_fallthru
      _
    // Predicated region
    $region42: #{tpu_custom_call.1} parent=1 // pred_check
      _
    $region43: #{tpu_custom_call.1} parent=1 // pred_check_branch
      %81 = sbr.rel (0) target = $region45
    $region44: #{tpu_custom_call.1} parent=1 // pred_region
      %82 = dma.done [#allocation6], 512
    $region45: #{tpu_custom_call.1} parent=1 // pred_fallthru
      _
    // Predicated region
    $region46: #{tpu_custom_call.1} parent=1 // pred_check
      _
    $region47: #{tpu_custom_call.1} parent=1 // pred_check_branch
      %84 = sbr.rel (0) target = $region49
    $region48: #{tpu_custom_call.1} parent=1 // pred_region
      %85 = dma.done [#allocation9], 512
    $region49: #{tpu_custom_call.1} parent=1 // pred_fallthru
      _
    %v86 = vld [vmem:[#allocation5] sm:$0xff]
    %v87 = vld [vmem:[#allocation5 + $0x8] sm:$0xff]
    %v88 = vld [vmem:[#allocation2] sm:$0x3]
    %v89 = vld [vmem:[#allocation7] sm:$0xff]
    %v90 = vld [vmem:[#allocation7 + $0x8] sm:$0xff]
    %v91 = vld [vmem:[#allocation7 + $0x10] sm:$0xff]
    %v92 = vld [vmem:[#allocation7 + $0x18] sm:$0xff]
    %vm93 = vcmask 261120
    %v95 = vsel %vm93, %v86, 0
    %v98 = vsel %vm93, %v87, 0
    %100 = vmatprep.subr.mxu0 0.0
    %101 = vmatpush1.msra.mxu0 %v89
    %102 = vmatprep.subr.mxu0 0.0
    %103 = vmatpush1.msra.mxu0 %v90
    %104 = vmatprep.subr.mxu0 0.0
    %105 = vmatpush1.msra.mxu0 %v91
    %106 = vmatprep.subr.mxu0 0.0
    %107 = vmatpush1.msra.mxu0 %v92
    %108 = vmatprep.subr.mxu0 0.0
    %109 = vmatpush1.msra.mxu0 0.0
    %110 = vmatprep.subr.mxu0 0.0
    %111 = vmatpush1.msra.mxu0 0.0
    %112 = vmatprep.subr.mxu0 0.0
    %113 = vmatpush1.msra.mxu0 0.0
    %114 = vmatprep.subr.mxu0 0.0
    %115 = vmatpush1.msra.mxu0 0.0
    %116 = vmatprep.subr.mxu0 0.0
    %117 = vmatpush1.msra.mxu0 0.0
    %118 = vmatprep.subr.mxu0 0.0
    %119 = vmatpush1.msra.mxu0 0.0
    %120 = vmatprep.subr.mxu0 0.0
    %121 = vmatpush1.msra.mxu0 0.0
    %122 = vmatprep.subr.mxu0 0.0
    %123 = vmatpush1.msra.mxu0 0.0
    %124 = vmatprep.subr.mxu0 0.0
    %125 = vmatpush1.msra.mxu0 0.0
    %126 = vmatprep.subr.mxu0 0.0
    %127 = vmatpush1.msra.mxu0 0.0
    %128 = vmatprep.subr.mxu0 0.0
    %129 = vmatpush1.msra.mxu0 0.0
    %130 = vmatprep.subr.mxu0 0.0
    %131 = vmatpush1.msra.mxu0 0.0
    %132 = vmatprep.subr.mxu0 0.0
    %133 = vmatpush1.msra.mxu0 0.0
    %134 = vmatprep.subr.mxu0 0.0
    %135 = vmatpush1.msra.mxu0 0.0
    %136 = vmatprep.subr.mxu0 0.0
    %137 = vmatpush1.msra.mxu0 0.0
    %138 = vmatprep.subr.mxu0 0.0
    %139 = vmatpush1.msra.mxu0 0.0
    %140 = vmatprep.subr.mxu0 0.0
    %141 = vmatpush1.msra.mxu0 0.0
    %142 = vmatprep.subr.mxu0 0.0
    %143 = vmatpush1.msra.mxu0 0.0
    %144 = vmatprep.subr.mxu0 0.0
    %145 = vmatpush1.msra.mxu0 0.0
    %146 = vmatprep.subr.mxu0 0.0
    %147 = vmatpush1.msra.mxu0 0.0
    %148 = vmatprep.subr.mxu0 0.0
    %149 = vmatpush1.msra.mxu0 0.0
    %150 = vmatprep.subr.mxu0 0.0
    %151 = vmatpush1.msra.mxu0 0.0
    %152 = vmatprep.subr.mxu0 0.0
    %153 = vmatpush1.msra.mxu0 0.0
    %154 = vmatprep.subr.mxu0 0.0
    %155 = vmatpush1.msra.mxu0 0.0
    %156 = vmatprep.subr.mxu0 0.0
    %157 = vmatpush1.msra.mxu0 0.0
    %158 = vmatprep.subr.mxu0 0.0
    %159 = vmatpush1.msra.mxu0 0.0
    %160 = vmatprep.subr.mxu0 0.0
    %161 = vmatpush1.msra.mxu0 0.0
    %162 = vmatprep.subr.mxu0 0.0
    %163 = vmatpush1.msra.mxu0 0.0
    %164 = vmatprep.mubr.f32.mxu0 0.0
    %165 = vmatmul.mubr.f32.gmra.mrb[0].mxu0 %v95
    %v166 = vpop.f32.mrb[0].mxu0
    %v167 = vadd.f32 0.0, %v166
    %v168 = vpop.f32.mrb[0].mxu0
    %169 = vmatprep.mubr.f32.mxu0 0.0
    %170 = vmatmul.mubr.f32.gmra.mrb[0].mxu0 %v98
    %v171 = vpop.f32.mrb[0].mxu0
    %v172 = vadd.f32 0.0, %v171
    %v173 = vpop.f32.mrb[0].mxu0
    %174 = vdwg.mxu0
    %v175 = vld [vmem:[#allocation8] sm:$0xff]
    %v176 = vld [vmem:[#allocation8 + $0x8] sm:$0xff]
    %v177 = vld [vmem:[#allocation8 + $0x10] sm:$0xff]
    %v178 = vld [vmem:[#allocation8 + $0x18] sm:$0xff]
    %v179 = vld [vmem:[%s6] sm:$0x1]
    %v181 = vlaneseq
    %v182 = vshrl.u32 %v181, 7
    %v183 = vsub.s32 0, %v182
    %v184 = vrot.slane %v179, %v183
    %v187 = vsel %vm93, %v88, 0
    %189 = vmatprep.subr.mxu0 0.0
    %190 = vmatpush1.msra.mxu0 %v175
    %191 = vmatprep.subr.mxu0 0.0
    %192 = vmatpush1.msra.mxu0 %v176
    %193 = vmatprep.subr.mxu0 0.0
    %194 = vmatpush1.msra.mxu0 %v177
    %195 = vmatprep.subr.mxu0 0.0
    %196 = vmatpush1.msra.mxu0 %v178
    %197 = vmatprep.subr.mxu0 0.0
    %198 = vmatpush1.msra.mxu0 0.0
    %199 = vmatprep.subr.mxu0 0.0
    %200 = vmatpush1.msra.mxu0 0.0
    %201 = vmatprep.subr.mxu0 0.0
    %202 = vmatpush1.msra.mxu0 0.0
    %203 = vmatprep.subr.mxu0 0.0
    %204 = vmatpush1.msra.mxu0 0.0
    %205 = vmatprep.subr.mxu0 0.0
    %206 = vmatpush1.msra.mxu0 0.0
    %207 = vmatprep.subr.mxu0 0.0
    %208 = vmatpush1.msra.mxu0 0.0
    %209 = vmatprep.subr.mxu0 0.0
    %210 = vmatpush1.msra.mxu0 0.0
    %211 = vmatprep.subr.mxu0 0.0
    %212 = vmatpush1.msra.mxu0 0.0
    %213 = vmatprep.subr.mxu0 0.0
    %214 = vmatpush1.msra.mxu0 0.0
    %215 = vmatprep.subr.mxu0 0.0
    %216 = vmatpush1.msra.mxu0 0.0
    %217 = vmatprep.subr.mxu0 0.0
    %218 = vmatpush1.msra.mxu0 0.0
    %219 = vmatprep.subr.mxu0 0.0
    %220 = vmatpush1.msra.mxu0 0.0
    %221 = vmatprep.subr.mxu0 0.0
    %222 = vmatpush1.msra.mxu0 0.0
    %223 = vmatprep.subr.mxu0 0.0
    %224 = vmatpush1.msra.mxu0 0.0
    %225 = vmatprep.subr.mxu0 0.0
    %226 = vmatpush1.msra.mxu0 0.0
    %227 = vmatprep.subr.mxu0 0.0
    %228 = vmatpush1.msra.mxu0 0.0
    %229 = vmatprep.subr.mxu0 0.0
    %230 = vmatpush1.msra.mxu0 0.0
    %231 = vmatprep.subr.mxu0 0.0
    %232 = vmatpush1.msra.mxu0 0.0
    %233 = vmatprep.subr.mxu0 0.0
    %234 = vmatpush1.msra.mxu0 0.0
    %235 = vmatprep.subr.mxu0 0.0
    %236 = vmatpush1.msra.mxu0 0.0
    %237 = vmatprep.subr.mxu0 0.0
    %238 = vmatpush1.msra.mxu0 0.0
    %239 = vmatprep.subr.mxu0 0.0
    %240 = vmatpush1.msra.mxu0 0.0
    %241 = vmatprep.subr.mxu0 0.0
    %242 = vmatpush1.msra.mxu0 0.0
    %243 = vmatprep.subr.mxu0 0.0
    %244 = vmatpush1.msra.mxu0 0.0
    %245 = vmatprep.subr.mxu0 0.0
    %246 = vmatpush1.msra.mxu0 0.0
    %247 = vmatprep.subr.mxu0 0.0
    %248 = vmatpush1.msra.mxu0 0.0
    %249 = vmatprep.subr.mxu0 0.0
    %250 = vmatpush1.msra.mxu0 0.0
    %251 = vmatprep.subr.mxu0 0.0
    %252 = vmatpush1.msra.mxu0 0.0
    %253 = vmatprep.mubr.f32.mxu0 0.0
    %254 = vmatmul.mubr.f32.gmra.mrb[0].mxu0 %v187
    %v255 = vpop.f32.mrb[0].mxu0
    %v256 = vadd.f32 %v184, %v255
    %v257 = vpop.f32.mrb[0].mxu0
    %258 = vdwg.mxu0
    %v259 = vld [vmem:[%s4] sm:$0x1]
    %v261 = vlaneseq
    %v262 = vshrl.u32 %v261, 7
    %v263 = vsub.s32 0, %v262
    %v264 = vrot.slane %v259, %v263
    %v266 = vadd.f32 %v256, %v264
    %v269 = vunpack.c.l.s4 1966171168
    %v270 = vunpack.c.0.s8 %v269
    %v271 = vlaneseq
    %v272 = vshrl.u32 %v271, 7
    %v273 = vsub.s32 %v270, %v272
    %v274 = vrot.slane %v266, %v273
    %v275 = vcombine.high %v274, %v274
    %v277 = vunpack.c.l.s4 1966171168
    %v278 = vunpack.c.0.s8 %v277
    %v279 = vlaneseq
    %v280 = vshrl.u32 %v279, 7
    %v281 = vsub.s32 %v278, %v280
    %v282 = vrot.slane %v274, %v281
    %v284 = vunpack.c.l.s4 1966171168
    %v285 = vunpack.c.0.s8 %v284
    %v286 = vlaneseq
    %v287 = vshrl.u32 %v286, 7
    %v288 = vsub.s32 %v285, %v287
    %v289 = vrot.slane %v275, %v288
    %v290 = vlaneseq
    %v291 = vshrl.u32 %v290, 7
    %v292 = vsub.s32 0, %v291
    %v293 = vrot.slane %v282, %v292
    %v294 = vlaneseq
    %v295 = vshrl.u32 %v294, 7
    %v296 = vsub.s32 0, %v295
    %v297 = vrot.slane %v289, %v296
    %v300 = vadd.f32 %v167, %v293
    %v301 = vadd.f32 %v172, %v297
    %v302 = vtanh.pop %v300
    %v303 = vtanh.pop %v301
    %v304 = vld [vmem:[%s7] sm:$0x1]
    %v306 = vlaneseq
    %v307 = vshrl.u32 %v306, 7
    %v308 = vsub.s32 0, %v307
    %v309 = vrot.slane %v304, %v308
    %v311 = vmul.f32 %v302, %v309
    %v312 = vmul.f32 %v303, %v309
    %v313 = vsel %vm93, %v311, 0.0
    %314 = vadd.xlane.f32.xlu0 %v313
    %v315 = vpop.xlane.xlu0 %314
    %v316 = vsel %vm93, %v312, 0.0
    %317 = vadd.xlane.f32.xlu0 %v316
    %v318 = vpop.xlane.xlu0 %317
    %v319 = vld [vmem:[%s2] sm:$0x3]
    %v321 = vlaneseq
    %v322 = vshrl.u32 %v321, 7
    %v323 = vsub.s32 0, %v322
    %v324 = vrot.slane %v319, %v323
    %326 = vbcast.lane.b32.xlu0 %v324, 256
    %v327 = vpop.permute.xlu0 %326
    %v328 = vlaneseq
    %v329 = vshrl.u32 %v328, 7
    %v330 = vsub.s32 1, %v329
    %v331 = vrot.slane %v319, %v330
    %333 = vbcast.lane.b32.xlu0 %v331, 256
    %v334 = vpop.permute.xlu0 %333
    %v337 = vadd.f32 %v315, %v327
    %v338 = vadd.f32 %v318, %v334
    %341 = vset.pattern.permute.xlu0 0
    %342 = vperm.xlu0 %341, %v337
    %v343 = vpop.permute.xlu0 %342
    %344 = vset.pattern.permute.xlu0 0
    %345 = vperm.xlu0 %344, %v338
    %v346 = vpop.permute.xlu0 %345
    %v347 = vlaneseq
    %v348 = vand.u32 %v347, 127
    %v349 = vlaneseq
    %v350 = vshrl.u32 %v349, 7
    %v351 = vsub.s32 %v348, %v350
    %v352 = vrot.slane %v343, %v351
    %v353 = vlaneseq
    %v354 = vshrl.u32 %v353, 7
    %v355 = vsub.s32 %v348, %v354
    %v356 = vrot.slane %v346, %v355
    %vm357 = vcmask 1041409
    %v358 = vsel %vm357, %v356, %v352
    %vm360 = vcmask 58368
    %v361 = vsel %vm360, %v358, -inf
    %362 = vmax.xlane.f32.xlu0 %v361
    %v363 = vpop.xlane.xlu0 %362
    %v365 = vlaneseq
    %v366 = vshrl.u32 %v365, 7
    %v367 = vsub.s32 0, %v366
    %v368 = vrot.slane %v363, %v367
    %v369 = vlaneseq
    %v370 = vshrl.u32 %v369, 7
    %v371 = vsub.s32 1, %v370
    %v372 = vrot.slane %v363, %v371
    %v375 = vsub.f32 %v337, %v368
    %v376 = vsub.f32 %v338, %v372
    %v377 = vmul.f32 %v375, 1.442695
    %v378 = vpow.pop %v377
    %v379 = vmul.f32 %v376, 1.442695
    %v380 = vpow.pop %v379
    %383 = vset.pattern.permute.xlu0 0
    %384 = vperm.xlu0 %383, %v378
    %v385 = vpop.permute.xlu0 %384
    %386 = vset.pattern.permute.xlu0 0
    %387 = vperm.xlu0 %386, %v380
    %v388 = vpop.permute.xlu0 %387
    %v389 = vlaneseq
    %v390 = vshrl.u32 %v389, 7
    %v391 = vsub.s32 %v348, %v390
    %v392 = vrot.slane %v385, %v391
    %v393 = vlaneseq
    %v394 = vshrl.u32 %v393, 7
    %v395 = vsub.s32 %v348, %v394
    %v396 = vrot.slane %v388, %v395
    %v397 = vsel %vm357, %v396, %v392
    %v399 = vsel %vm360, %v397, 0.0
    %400 = vadd.xlane.f32.xlu0 %v399
    %v401 = vpop.xlane.xlu0 %400
    %v402 = vrcp.pop %v401
    %v404 = vlaneseq
    %v405 = vshrl.u32 %v404, 7
    %v406 = vsub.s32 0, %v405
    %v407 = vrot.slane %v402, %v406
    %v408 = vlaneseq
    %v409 = vshrl.u32 %v408, 7
    %v410 = vsub.s32 1, %v409
    %v411 = vrot.slane %v402, %v410
    %v414 = vmul.f32 %v378, %v407
    %v415 = vmul.f32 %v380, %v411
    %417 = vset.pattern.permute.xlu0 0
    %418 = vperm.xlu0 %417, %v414
    %v419 = vpop.permute.xlu0 %418
    %422 = vset.pattern.permute.xlu0 0
    %423 = vperm.xlu0 %422, %v415
    %v424 = vpop.permute.xlu0 %423
    %v426 = vmul.f32 %v419, %v86
    %v427 = vmul.f32 %v424, %v87
    %v428 = vsel %vm93, %v426, 0.0
    %v429 = vrot.slane %v428, 4
    %v430 = vadd.f32 %v428, %v429
    %v431 = vrot.slane %v430, 2
    %v432 = vadd.f32 %v430, %v431
    %v433 = vrot.slane %v432, 1
    %v434 = vadd.f32 %v432, %v433
    %v435 = vsel %vm93, %v427, 0.0
    %v436 = vrot.slane %v435, 4
    %v437 = vadd.f32 %v435, %v436
    %v438 = vrot.slane %v437, 2
    %v439 = vadd.f32 %v437, %v438
    %v440 = vrot.slane %v439, 1
    %v441 = vadd.f32 %v439, %v440
    %v444 = vsel %vm357, %v441, %v434
    %vm446 = vcmask 254976
    %447 = vst.msk [vmem:[#allocation10] sm:$0x3] %vm446, %v444
    %v448 = vlaneseq
    %v449 = vshrl.u32 %v448, 7
    %v450 = vsub.s32 %v348, %v449
    %v451 = vrot.slane %v419, %v450
    %v452 = vlaneseq
    %v453 = vshrl.u32 %v452, 7
    %v454 = vsub.s32 %v348, %v453
    %v455 = vrot.slane %v424, %v454
    %v456 = vsel %vm357, %v455, %v451
    %458 = vst.msk [vmem:[#allocation11] sm:$0x3] %vm360, %v456
    // Predicated region
    $region50: #{tpu_custom_call.1} parent=1 // pred_check
      _
    $region51: #{tpu_custom_call.1} parent=1 // pred_check_branch
      %460 = sbr.rel (0) target = $region53
    $region52: #{tpu_custom_call.1} parent=1 // pred_region
      %s462 = ssub.s32 32, 32
      %463 = vsyncadd [#allocation4], %s462
      %s465 = sshll.u32 [#allocation10], 4
      %s466 = int_to_ptr.vmem [resolvable:$true] %s465
      %468 = dma.vmem_to_hbm [thread:$0]  %s466, 32, %s8, [#allocation4]
    $region53: #{tpu_custom_call.1} parent=1 // pred_fallthru
      _
    // Predicated region
    $region54: #{tpu_custom_call.1} parent=1 // pred_check
      _
    $region55: #{tpu_custom_call.1} parent=1 // pred_check_branch
      %470 = sbr.rel (0) target = $region57
    $region56: #{tpu_custom_call.1} parent=1 // pred_region
      %s472 = ssub.s32 32, 32
      %473 = vsyncadd [#allocation12], %s472
      %s475 = sshll.u32 [#allocation11], 4
      %s476 = int_to_ptr.vmem [resolvable:$true] %s475
      %478 = dma.vmem_to_hbm [thread:$0]  %s476, 32, %s9, [#allocation12]
    $region57: #{tpu_custom_call.1} parent=1 // pred_fallthru
      _
    // Predicated region
    $region58: #{tpu_custom_call.1} parent=1 // pred_check
      _
    $region59: #{tpu_custom_call.1} parent=1 // pred_check_branch
      %480 = sbr.rel (0) target = $region61
    $region60: #{tpu_custom_call.1} parent=1 // pred_region
      %481 = dma.done [#allocation4], 32
    $region61: #{tpu_custom_call.1} parent=1 // pred_fallthru
      _
    // Predicated region
    $region62: #{tpu_custom_call.1} parent=1 // pred_check
      _
    $region63: #{tpu_custom_call.1} parent=1 // pred_check_branch
      %483 = sbr.rel (0) target = $region65
    $region64: #{tpu_custom_call.1} parent=1 // pred_region
      %484 = dma.done [#allocation12], 32
    $region65: #{tpu_custom_call.1} parent=1 // pred_fallthru
      _
    %485 = vsyncpa [#allocation3], 1
    %486 = vsyncpa [#allocation6], 1
    %487 = vsyncpa [#allocation9], 1
    %488 = vsyncpa [#allocation4], 1
    %489 = vsyncpa [#allocation12], 1

</llo_original>
